<compile_context>
chip_gen: v5e
topology: v5e:2x2
jax: 0.10.0
libtpu: 0.0.40
codegen_flags: <defaults>
</compile_context>

<pallas_src>
import jax
import jax.numpy as jnp
from jax import lax
from jax.experimental import pallas as pl
from jax.experimental.pallas import tpu as pltpu

# Module hyper-parameters (synthetic, small)
VOCAB_SIZE = 16
REGEX_EMBEDDING_DIMENSION = 32   # E
LSTM_DIMENSION = 32              # H


def embedding_lstm_kernel(tok_ref, table_ref, bias_ref, whh_f_ref, out_ref):
    # tok_ref   : [T*B, 1] int32   time-major tokens (layout done in the wrapper)
    # table_ref : [V, 8H]  f32     [embed @ W_ih_f^T | embed @ W_ih_b^T], i/f/o cols * 0.5
    # bias_ref  : [1, 8H]  f32     [b_ih_f + b_hh_f  | b_ih_b + b_hh_b ], i/f/o cols * 0.5
    # whh_f_ref : [H, 4H]  f32     forward W_hh^T, i/f/o cols * 0.5
    # out_ref   : [B, 2H]  f32
    TB = tok_ref.shape[0]
    V = table_ref.shape[0]
    H = whh_f_ref.shape[0]
    G = 4 * H
    B = out_ref.shape[0]
    T = TB // B

    # ---- ONE MXU pass: input projections for all T steps and both directions ----
    # (padding_idx=0: embed row 0 is zero, so table row 0 is zero as well.
    #  Out-of-range token ids give an all-zero one-hot row instead of erroring
    #  like nn.Embedding would — benign, inputs are generated in range.)
    tok = tok_ref[...]                                          # [T*B, 1]
    vocab_iota = lax.broadcasted_iota(jnp.int32, (TB, V), 1)
    onehot = (vocab_iota == tok).astype(jnp.float32)            # [T*B, V]
    gx = jnp.dot(onehot, table_ref[...],
                 preferred_element_type=jnp.float32)            # [T*B, 8H]
    gx = gx + bias_ref[...]                                     # biases folded once

    whh_f = whh_f_ref[...]

    # Hoisted activation constants: gate order i, f, g, o (matches PyTorch).
    # i/f/o pre-activations arrive halved, so sigmoid(x) = 0.5*tanh(x/2) + 0.5.
    lane = lax.broadcasted_iota(jnp.int32, (B, G), 1)
    g_lane = (lane >= 2 * H) & (lane < 3 * H)
    act_scale = jnp.where(g_lane, jnp.float32(1.0), jnp.float32(0.5))
    act_offset = jnp.where(g_lane, jnp.float32(0.0), jnp.float32(0.5))

    def cell(gates, c):
        # Single EUP tanh on the full [B, 4H] vreg, then a fused scale+offset (VPU).
        t = jnp.tanh(gates)
        act = t * act_scale + act_offset
        i = act[:, 0 * H:1 * H]
        f = act[:, 1 * H:2 * H]
        g = act[:, 2 * H:3 * H]
        o = act[:, 3 * H:4 * H]
        c_new = f * c + i * g
        h_new = o * jnp.tanh(c_new)
        return h_new, c_new

    # ---- Forward direction: only h @ W_hh^T sits on the serial chain (T small & static) ----
    h = jnp.zeros((B, H), jnp.float32)
    c = jnp.zeros((B, H), jnp.float32)
    for t_step in range(T):
        gx_t = gx[t_step * B:(t_step + 1) * B, 0:G]             # leading-axis row slice
        gates = gx_t + jnp.dot(h, whh_f, preferred_element_type=jnp.float32)
        h, c = cell(gates, c)
    h_fwd = h

    # ---- Backward direction at output[:, -1]: one step on x_{T-1} from zero state.
    #      h0 == 0  =>  the W_hh_b term is exactly zero, so no matmul is needed. ----
    h_bwd, _ = cell(gx[(T - 1) * B:TB, G:2 * G], jnp.zeros((B, H), jnp.float32))

    # Single store instead of two masked sub-128-lane partial stores.
    out_ref[...] = jnp.concatenate([h_fwd, h_bwd], axis=-1)


def embedding_with_lstm(tokens, params):
    """tokens: [B, T] int32 -> [B, 2*H] float32."""
    B, T = tokens.shape
    H = LSTM_DIMENSION
    # Layout plumbing done in XLA on the HBM side: time-major [T*B, 1] rows so the
    # kernel never reshapes across the (8,128) tile layout.
    tok_tm = tokens.T.reshape(T * B, 1)
    # All operands total a few KB: no grid / BlockSpec tiling — extra grid steps
    # (~0.35 us each) would dominate this latency-bound kernel on every TPU gen.
    return pl.pallas_call(
        embedding_lstm_kernel,
        out_shape=jax.ShapeDtypeStruct((B, 2 * H), jnp.float32),
        in_specs=[
            pl.BlockSpec(memory_space=pltpu.MemorySpace.VMEM),  # tokens [T*B, 1]
            pl.BlockSpec(memory_space=pltpu.MemorySpace.VMEM),  # fused table [V, 8H]
            pl.BlockSpec(memory_space=pltpu.MemorySpace.VMEM),  # fused biases [1, 8H]
            pl.BlockSpec(memory_space=pltpu.MemorySpace.VMEM),  # forward W_hh^T [H, 4H]
        ],
        out_specs=pl.BlockSpec(memory_space=pltpu.MemorySpace.VMEM),
    )(tok_tm, params["k_table"], params["k_bias"], params["k_whh_f"])


def init_params(key):
    """Deterministic synthetic parameters matching nn.Embedding / nn.LSTM shapes."""
    E, H, V = REGEX_EMBEDDING_DIMENSION, LSTM_DIMENSION, VOCAB_SIZE
    ks = jax.random.split(key, 9)
    scale = 1.0 / jnp.sqrt(jnp.float32(H))

    embed = jax.random.normal(ks[0], (V, E), jnp.float32)
    embed = embed.at[0].set(0.0)  # padding_idx=0

    def u(k, shape):
        return jax.random.uniform(k, shape, jnp.float32, -scale, scale)

    # PyTorch stores weight_ih_l0: [4H, E], weight_hh_l0: [4H, H]; we keep transposes.
    wih_f = u(ks[1], (E, 4 * H))
    whh_f = u(ks[2], (H, 4 * H))
    b_f = u(ks[3], (1, 4 * H)) + u(ks[4], (1, 4 * H))   # bias_ih + bias_hh fused
    wih_b = u(ks[5], (E, 4 * H))
    whh_b = u(ks[6], (H, 4 * H))
    b_b = u(ks[7], (1, 4 * H)) + u(ks[8], (1, 4 * H))

    # Fuse the embedding with both input projections ONCE at init (outside the kernel):
    # one [V, 8H] table lets a single one-hot matmul produce every per-step gate input.
    table_fused = jnp.concatenate(
        [jnp.dot(embed, wih_f, preferred_element_type=jnp.float32),
         jnp.dot(embed, wih_b, preferred_element_type=jnp.float32)], axis=1)
    bias_fused = jnp.concatenate([b_f, b_b], axis=1)

    # Pre-scale i/f/o gate columns by 0.5 (exact in f32) so the kernel needs only a
    # single tanh per step: sigmoid(x) = 0.5 * tanh(x/2) + 0.5.  Gate order i, f, g, o.
    gate_idx = jnp.arange(4 * H)
    is_g_col = (gate_idx >= 2 * H) & (gate_idx < 3 * H)
    gscale4 = jnp.where(is_g_col, jnp.float32(1.0), jnp.float32(0.5))   # [4H]
    gscale8 = jnp.concatenate([gscale4, gscale4])                       # [8H]

    return {
        # exact (unscaled) parameters for the pure-JAX reference
        "embed": embed,
        "wih_f": wih_f, "whh_f": whh_f, "b_f": b_f,
        "wih_b": wih_b, "whh_b": whh_b, "b_b": b_b,
        # kernel operands (gate columns pre-scaled for the single-tanh activation)
        "k_table": table_fused * gscale8[None, :],
        "k_bias": bias_fused * gscale8[None, :],
        "k_whh_f": whh_f * gscale4[None, :],
    }


def _lstm_cell_ref(x_t, h, c, w_ih_t, w_hh_t, bias, H):
    """PyTorch-style LSTM cell step (reference only). Gate order: i, f, g, o."""
    gates = (jnp.dot(x_t, w_ih_t, preferred_element_type=jnp.float32)
             + jnp.dot(h, w_hh_t, preferred_element_type=jnp.float32)
             + bias)
    i = jax.nn.sigmoid(gates[:, 0 * H:1 * H])
    f = jax.nn.sigmoid(gates[:, 1 * H:2 * H])
    g = jnp.tanh(gates[:, 2 * H:3 * H])
    o = jax.nn.sigmoid(gates[:, 3 * H:4 * H])
    c_new = f * c + i * g
    h_new = o * jnp.tanh(c_new)
    return h_new, c_new


def reference(tokens, params):
    """Pure-JAX reference with the module's math (for a sanity check)."""
    B, T = tokens.shape
    H = LSTM_DIMENSION
    x = jnp.take(params["embed"], tokens, axis=0)  # [B, T, E]
    h = jnp.zeros((B, H), jnp.float32)
    c = jnp.zeros((B, H), jnp.float32)
    for t in range(T):
        h, c = _lstm_cell_ref(x[:, t, :], h, c,
                              params["wih_f"], params["whh_f"], params["b_f"], H)
    h_bwd, _ = _lstm_cell_ref(x[:, T - 1, :],
                              jnp.zeros((B, H), jnp.float32),
                              jnp.zeros((B, H), jnp.float32),
                              params["wih_b"], params["whh_b"], params["b_b"], H)
    return jnp.concatenate([h, h_bwd], axis=-1)


if __name__ == "__main__":
    key = jax.random.PRNGKey(0)
    k_tok, k_par = jax.random.split(key)

    B, T = 2, 8
    tokens = jax.random.randint(k_tok, (B, T), 0, VOCAB_SIZE, dtype=jnp.int32)
    params = init_params(k_par)

    out = embedding_with_lstm(tokens, params)
    out = jax.block_until_ready(out)

    ref = reference(tokens, params)
    assert out.shape == (B, 2 * LSTM_DIMENSION)
    assert jnp.allclose(out, ref, atol=2e-5, rtol=2e-5)

    print("KERNEL_OK")
</pallas_src>

<mosaic_0001>
module attributes {stable_mosaic.version = 11 : i64} {
  func.func @embedding_lstm_kernel(%arg0: memref<16x1xi32, #tpu.memory_space<vmem>>, %arg1: memref<16x256xf32, #tpu.memory_space<vmem>>, %arg2: memref<1x256xf32, #tpu.memory_space<vmem>>, %arg3: memref<32x128xf32, #tpu.memory_space<vmem>>, %arg4: memref<2x64xf32, #tpu.memory_space<vmem>>) attributes {dimension_semantics = [], scalar_prefetch = 0 : i64, scratch_operands = 0 : i64, tpu.core_type = #tpu.core_type<tc>} {
    %c0 = arith.constant 0 : index
    %c0_0 = arith.constant 0 : index
    %0 = vector.load %arg0[%c0, %c0_0] : memref<16x1xi32, #tpu.memory_space<vmem>>, vector<16x1xi32>
    %1 = tpu.iota {dimensions = array<i32: 1>} : vector<16x16xi32>
    %2 = vector.broadcast %0 : vector<16x1xi32> to vector<16x16xi32>
    %3 = arith.cmpi eq, %1, %2 : vector<16x16xi32>
    %4 = arith.extui %3 : vector<16x16xi1> to vector<16x16xi32>
    %5 = arith.sitofp %4 : vector<16x16xi32> to vector<16x16xf32>
    %c0_1 = arith.constant 0 : index
    %c0_2 = arith.constant 0 : index
    %6 = vector.load %arg1[%c0_1, %c0_2] : memref<16x256xf32, #tpu.memory_space<vmem>>, vector<16x256xf32>
    %cst = arith.constant dense<0.000000e+00> : vector<16x256xf32>
    %7 = tpu.matmul %5, %6, %cst {dimension_numbers = #tpu.dot_dimension_numbers<[1], [0], [0], [1], [0, 0, 1, 1], [], []>} : vector<16x16xf32>, vector<16x256xf32>, vector<16x256xf32> -> vector<16x256xf32>
    %c0_3 = arith.constant 0 : index
    %c0_4 = arith.constant 0 : index
    %8 = vector.load %arg2[%c0_3, %c0_4] : memref<1x256xf32, #tpu.memory_space<vmem>>, vector<1x256xf32>
    %9 = vector.broadcast %8 : vector<1x256xf32> to vector<16x256xf32>
    %10 = arith.addf %7, %9 : vector<16x256xf32>
    %c0_5 = arith.constant 0 : index
    %c0_6 = arith.constant 0 : index
    %11 = vector.load %arg3[%c0_5, %c0_6] : memref<32x128xf32, #tpu.memory_space<vmem>>, vector<32x128xf32>
    %12 = tpu.iota {dimensions = array<i32: 1>} : vector<2x128xi32>
    %c64_i32 = arith.constant 64 : i32
    %13 = vector.broadcast %c64_i32 : i32 to vector<2x128xi32>
    %14 = arith.cmpi sge, %12, %13 : vector<2x128xi32>
    %c96_i32 = arith.constant 96 : i32
    %15 = vector.broadcast %c96_i32 : i32 to vector<2x128xi32>
    %16 = arith.cmpi slt, %12, %15 : vector<2x128xi32>
    %17 = arith.andi %14, %16 : vector<2x128xi1>
    %cst_7 = arith.constant 1.000000e+00 : f32
    %cst_8 = arith.constant 5.000000e-01 : f32
    %18 = vector.broadcast %cst_7 : f32 to vector<2x128xf32>
    %19 = vector.broadcast %cst_8 : f32 to vector<2x128xf32>
    %20 = arith.select %17, %18, %19 : vector<2x128xi1>, vector<2x128xf32>
    %cst_9 = arith.constant 0.000000e+00 : f32
    %cst_10 = arith.constant 5.000000e-01 : f32
    %21 = vector.broadcast %cst_9 : f32 to vector<2x128xf32>
    %22 = vector.broadcast %cst_10 : f32 to vector<2x128xf32>
    %23 = arith.select %17, %21, %22 : vector<2x128xi1>, vector<2x128xf32>
    %cst_11 = arith.constant 0.000000e+00 : f32
    %24 = vector.broadcast %cst_11 : f32 to vector<2x32xf32>
    %cst_12 = arith.constant 0.000000e+00 : f32
    %25 = vector.broadcast %cst_12 : f32 to vector<2x32xf32>
    %26 = vector.extract_strided_slice %10 {offsets = [0, 0], sizes = [2, 128], strides = [1, 1]} : vector<16x256xf32> to vector<2x128xf32>
    %cst_13 = arith.constant dense<0.000000e+00> : vector<2x128xf32>
    %27 = tpu.matmul %24, %11, %cst_13 {dimension_numbers = #tpu.dot_dimension_numbers<[1], [0], [0], [1], [0, 0, 1, 1], [], []>} : vector<2x32xf32>, vector<32x128xf32>, vector<2x128xf32> -> vector<2x128xf32>
    %28 = arith.addf %26, %27 : vector<2x128xf32>
    %29 = math.tanh %28 : vector<2x128xf32>
    %30 = arith.mulf %29, %20 : vector<2x128xf32>
    %31 = arith.addf %30, %23 : vector<2x128xf32>
    %32 = vector.extract_strided_slice %31 {offsets = [0, 0], sizes = [2, 32], strides = [1, 1]} : vector<2x128xf32> to vector<2x32xf32>
    %33 = vector.extract_strided_slice %31 {offsets = [0, 32], sizes = [2, 32], strides = [1, 1]} : vector<2x128xf32> to vector<2x32xf32>
    %34 = vector.extract_strided_slice %31 {offsets = [0, 64], sizes = [2, 32], strides = [1, 1]} : vector<2x128xf32> to vector<2x32xf32>
    %35 = vector.extract_strided_slice %31 {offsets = [0, 96], sizes = [2, 32], strides = [1, 1]} : vector<2x128xf32> to vector<2x32xf32>
    %36 = arith.mulf %33, %25 : vector<2x32xf32>
    %37 = arith.mulf %32, %34 : vector<2x32xf32>
    %38 = arith.addf %36, %37 : vector<2x32xf32>
    %39 = math.tanh %38 : vector<2x32xf32>
    %40 = arith.mulf %35, %39 : vector<2x32xf32>
    %41 = vector.extract_strided_slice %10 {offsets = [2, 0], sizes = [2, 128], strides = [1, 1]} : vector<16x256xf32> to vector<2x128xf32>
    %cst_14 = arith.constant dense<0.000000e+00> : vector<2x128xf32>
    %42 = tpu.matmul %40, %11, %cst_14 {dimension_numbers = #tpu.dot_dimension_numbers<[1], [0], [0], [1], [0, 0, 1, 1], [], []>} : vector<2x32xf32>, vector<32x128xf32>, vector<2x128xf32> -> vector<2x128xf32>
    %43 = arith.addf %41, %42 : vector<2x128xf32>
    %44 = math.tanh %43 : vector<2x128xf32>
    %45 = arith.mulf %44, %20 : vector<2x128xf32>
    %46 = arith.addf %45, %23 : vector<2x128xf32>
    %47 = vector.extract_strided_slice %46 {offsets = [0, 0], sizes = [2, 32], strides = [1, 1]} : vector<2x128xf32> to vector<2x32xf32>
    %48 = vector.extract_strided_slice %46 {offsets = [0, 32], sizes = [2, 32], strides = [1, 1]} : vector<2x128xf32> to vector<2x32xf32>
    %49 = vector.extract_strided_slice %46 {offsets = [0, 64], sizes = [2, 32], strides = [1, 1]} : vector<2x128xf32> to vector<2x32xf32>
    %50 = vector.extract_strided_slice %46 {offsets = [0, 96], sizes = [2, 32], strides = [1, 1]} : vector<2x128xf32> to vector<2x32xf32>
    %51 = arith.mulf %48, %38 : vector<2x32xf32>
    %52 = arith.mulf %47, %49 : vector<2x32xf32>
    %53 = arith.addf %51, %52 : vector<2x32xf32>
    %54 = math.tanh %53 : vector<2x32xf32>
    %55 = arith.mulf %50, %54 : vector<2x32xf32>
    %56 = vector.extract_strided_slice %10 {offsets = [4, 0], sizes = [2, 128], strides = [1, 1]} : vector<16x256xf32> to vector<2x128xf32>
    %cst_15 = arith.constant dense<0.000000e+00> : vector<2x128xf32>
    %57 = tpu.matmul %55, %11, %cst_15 {dimension_numbers = #tpu.dot_dimension_numbers<[1], [0], [0], [1], [0, 0, 1, 1], [], []>} : vector<2x32xf32>, vector<32x128xf32>, vector<2x128xf32> -> vector<2x128xf32>
    %58 = arith.addf %56, %57 : vector<2x128xf32>
    %59 = math.tanh %58 : vector<2x128xf32>
    %60 = arith.mulf %59, %20 : vector<2x128xf32>
    %61 = arith.addf %60, %23 : vector<2x128xf32>
    %62 = vector.extract_strided_slice %61 {offsets = [0, 0], sizes = [2, 32], strides = [1, 1]} : vector<2x128xf32> to vector<2x32xf32>
    %63 = vector.extract_strided_slice %61 {offsets = [0, 32], sizes = [2, 32], strides = [1, 1]} : vector<2x128xf32> to vector<2x32xf32>
    %64 = vector.extract_strided_slice %61 {offsets = [0, 64], sizes = [2, 32], strides = [1, 1]} : vector<2x128xf32> to vector<2x32xf32>
    %65 = vector.extract_strided_slice %61 {offsets = [0, 96], sizes = [2, 32], strides = [1, 1]} : vector<2x128xf32> to vector<2x32xf32>
    %66 = arith.mulf %63, %53 : vector<2x32xf32>
    %67 = arith.mulf %62, %64 : vector<2x32xf32>
    %68 = arith.addf %66, %67 : vector<2x32xf32>
    %69 = math.tanh %68 : vector<2x32xf32>
    %70 = arith.mulf %65, %69 : vector<2x32xf32>
    %71 = vector.extract_strided_slice %10 {offsets = [6, 0], sizes = [2, 128], strides = [1, 1]} : vector<16x256xf32> to vector<2x128xf32>
    %cst_16 = arith.constant dense<0.000000e+00> : vector<2x128xf32>
    %72 = tpu.matmul %70, %11, %cst_16 {dimension_numbers = #tpu.dot_dimension_numbers<[1], [0], [0], [1], [0, 0, 1, 1], [], []>} : vector<2x32xf32>, vector<32x128xf32>, vector<2x128xf32> -> vector<2x128xf32>
    %73 = arith.addf %71, %72 : vector<2x128xf32>
    %74 = math.tanh %73 : vector<2x128xf32>
    %75 = arith.mulf %74, %20 : vector<2x128xf32>
    %76 = arith.addf %75, %23 : vector<2x128xf32>
    %77 = vector.extract_strided_slice %76 {offsets = [0, 0], sizes = [2, 32], strides = [1, 1]} : vector<2x128xf32> to vector<2x32xf32>
    %78 = vector.extract_strided_slice %76 {offsets = [0, 32], sizes = [2, 32], strides = [1, 1]} : vector<2x128xf32> to vector<2x32xf32>
    %79 = vector.extract_strided_slice %76 {offsets = [0, 64], sizes = [2, 32], strides = [1, 1]} : vector<2x128xf32> to vector<2x32xf32>
    %80 = vector.extract_strided_slice %76 {offsets = [0, 96], sizes = [2, 32], strides = [1, 1]} : vector<2x128xf32> to vector<2x32xf32>
    %81 = arith.mulf %78, %68 : vector<2x32xf32>
    %82 = arith.mulf %77, %79 : vector<2x32xf32>
    %83 = arith.addf %81, %82 : vector<2x32xf32>
    %84 = math.tanh %83 : vector<2x32xf32>
    %85 = arith.mulf %80, %84 : vector<2x32xf32>
    %86 = vector.extract_strided_slice %10 {offsets = [8, 0], sizes = [2, 128], strides = [1, 1]} : vector<16x256xf32> to vector<2x128xf32>
    %cst_17 = arith.constant dense<0.000000e+00> : vector<2x128xf32>
    %87 = tpu.matmul %85, %11, %cst_17 {dimension_numbers = #tpu.dot_dimension_numbers<[1], [0], [0], [1], [0, 0, 1, 1], [], []>} : vector<2x32xf32>, vector<32x128xf32>, vector<2x128xf32> -> vector<2x128xf32>
    %88 = arith.addf %86, %87 : vector<2x128xf32>
    %89 = math.tanh %88 : vector<2x128xf32>
    %90 = arith.mulf %89, %20 : vector<2x128xf32>
    %91 = arith.addf %90, %23 : vector<2x128xf32>
    %92 = vector.extract_strided_slice %91 {offsets = [0, 0], sizes = [2, 32], strides = [1, 1]} : vector<2x128xf32> to vector<2x32xf32>
    %93 = vector.extract_strided_slice %91 {offsets = [0, 32], sizes = [2, 32], strides = [1, 1]} : vector<2x128xf32> to vector<2x32xf32>
    %94 = vector.extract_strided_slice %91 {offsets = [0, 64], sizes = [2, 32], strides = [1, 1]} : vector<2x128xf32> to vector<2x32xf32>
    %95 = vector.extract_strided_slice %91 {offsets = [0, 96], sizes = [2, 32], strides = [1, 1]} : vector<2x128xf32> to vector<2x32xf32>
    %96 = arith.mulf %93, %83 : vector<2x32xf32>
    %97 = arith.mulf %92, %94 : vector<2x32xf32>
    %98 = arith.addf %96, %97 : vector<2x32xf32>
    %99 = math.tanh %98 : vector<2x32xf32>
    %100 = arith.mulf %95, %99 : vector<2x32xf32>
    %101 = vector.extract_strided_slice %10 {offsets = [10, 0], sizes = [2, 128], strides = [1, 1]} : vector<16x256xf32> to vector<2x128xf32>
    %cst_18 = arith.constant dense<0.000000e+00> : vector<2x128xf32>
    %102 = tpu.matmul %100, %11, %cst_18 {dimension_numbers = #tpu.dot_dimension_numbers<[1], [0], [0], [1], [0, 0, 1, 1], [], []>} : vector<2x32xf32>, vector<32x128xf32>, vector<2x128xf32> -> vector<2x128xf32>
    %103 = arith.addf %101, %102 : vector<2x128xf32>
    %104 = math.tanh %103 : vector<2x128xf32>
    %105 = arith.mulf %104, %20 : vector<2x128xf32>
    %106 = arith.addf %105, %23 : vector<2x128xf32>
    %107 = vector.extract_strided_slice %106 {offsets = [0, 0], sizes = [2, 32], strides = [1, 1]} : vector<2x128xf32> to vector<2x32xf32>
    %108 = vector.extract_strided_slice %106 {offsets = [0, 32], sizes = [2, 32], strides = [1, 1]} : vector<2x128xf32> to vector<2x32xf32>
    %109 = vector.extract_strided_slice %106 {offsets = [0, 64], sizes = [2, 32], strides = [1, 1]} : vector<2x128xf32> to vector<2x32xf32>
    %110 = vector.extract_strided_slice %106 {offsets = [0, 96], sizes = [2, 32], strides = [1, 1]} : vector<2x128xf32> to vector<2x32xf32>
    %111 = arith.mulf %108, %98 : vector<2x32xf32>
    %112 = arith.mulf %107, %109 : vector<2x32xf32>
    %113 = arith.addf %111, %112 : vector<2x32xf32>
    %114 = math.tanh %113 : vector<2x32xf32>
    %115 = arith.mulf %110, %114 : vector<2x32xf32>
    %116 = vector.extract_strided_slice %10 {offsets = [12, 0], sizes = [2, 128], strides = [1, 1]} : vector<16x256xf32> to vector<2x128xf32>
    %cst_19 = arith.constant dense<0.000000e+00> : vector<2x128xf32>
    %117 = tpu.matmul %115, %11, %cst_19 {dimension_numbers = #tpu.dot_dimension_numbers<[1], [0], [0], [1], [0, 0, 1, 1], [], []>} : vector<2x32xf32>, vector<32x128xf32>, vector<2x128xf32> -> vector<2x128xf32>
    %118 = arith.addf %116, %117 : vector<2x128xf32>
    %119 = math.tanh %118 : vector<2x128xf32>
    %120 = arith.mulf %119, %20 : vector<2x128xf32>
    %121 = arith.addf %120, %23 : vector<2x128xf32>
    %122 = vector.extract_strided_slice %121 {offsets = [0, 0], sizes = [2, 32], strides = [1, 1]} : vector<2x128xf32> to vector<2x32xf32>
    %123 = vector.extract_strided_slice %121 {offsets = [0, 32], sizes = [2, 32], strides = [1, 1]} : vector<2x128xf32> to vector<2x32xf32>
    %124 = vector.extract_strided_slice %121 {offsets = [0, 64], sizes = [2, 32], strides = [1, 1]} : vector<2x128xf32> to vector<2x32xf32>
    %125 = vector.extract_strided_slice %121 {offsets = [0, 96], sizes = [2, 32], strides = [1, 1]} : vector<2x128xf32> to vector<2x32xf32>
    %126 = arith.mulf %123, %113 : vector<2x32xf32>
    %127 = arith.mulf %122, %124 : vector<2x32xf32>
    %128 = arith.addf %126, %127 : vector<2x32xf32>
    %129 = math.tanh %128 : vector<2x32xf32>
    %130 = arith.mulf %125, %129 : vector<2x32xf32>
    %131 = vector.extract_strided_slice %10 {offsets = [14, 0], sizes = [2, 128], strides = [1, 1]} : vector<16x256xf32> to vector<2x128xf32>
    %cst_20 = arith.constant dense<0.000000e+00> : vector<2x128xf32>
    %132 = tpu.matmul %130, %11, %cst_20 {dimension_numbers = #tpu.dot_dimension_numbers<[1], [0], [0], [1], [0, 0, 1, 1], [], []>} : vector<2x32xf32>, vector<32x128xf32>, vector<2x128xf32> -> vector<2x128xf32>
    %133 = arith.addf %131, %132 : vector<2x128xf32>
    %134 = math.tanh %133 : vector<2x128xf32>
    %135 = arith.mulf %134, %20 : vector<2x128xf32>
    %136 = arith.addf %135, %23 : vector<2x128xf32>
    %137 = vector.extract_strided_slice %136 {offsets = [0, 0], sizes = [2, 32], strides = [1, 1]} : vector<2x128xf32> to vector<2x32xf32>
    %138 = vector.extract_strided_slice %136 {offsets = [0, 32], sizes = [2, 32], strides = [1, 1]} : vector<2x128xf32> to vector<2x32xf32>
    %139 = vector.extract_strided_slice %136 {offsets = [0, 64], sizes = [2, 32], strides = [1, 1]} : vector<2x128xf32> to vector<2x32xf32>
    %140 = vector.extract_strided_slice %136 {offsets = [0, 96], sizes = [2, 32], strides = [1, 1]} : vector<2x128xf32> to vector<2x32xf32>
    %141 = arith.mulf %138, %128 : vector<2x32xf32>
    %142 = arith.mulf %137, %139 : vector<2x32xf32>
    %143 = arith.addf %141, %142 : vector<2x32xf32>
    %144 = math.tanh %143 : vector<2x32xf32>
    %145 = arith.mulf %140, %144 : vector<2x32xf32>
    %146 = vector.extract_strided_slice %10 {offsets = [14, 128], sizes = [2, 128], strides = [1, 1]} : vector<16x256xf32> to vector<2x128xf32>
    %cst_21 = arith.constant 0.000000e+00 : f32
    %147 = vector.broadcast %cst_21 : f32 to vector<2x32xf32>
    %148 = math.tanh %146 : vector<2x128xf32>
    %149 = arith.mulf %148, %20 : vector<2x128xf32>
    %150 = arith.addf %149, %23 : vector<2x128xf32>
    %151 = vector.extract_strided_slice %150 {offsets = [0, 0], sizes = [2, 32], strides = [1, 1]} : vector<2x128xf32> to vector<2x32xf32>
    %152 = vector.extract_strided_slice %150 {offsets = [0, 32], sizes = [2, 32], strides = [1, 1]} : vector<2x128xf32> to vector<2x32xf32>
    %153 = vector.extract_strided_slice %150 {offsets = [0, 64], sizes = [2, 32], strides = [1, 1]} : vector<2x128xf32> to vector<2x32xf32>
    %154 = vector.extract_strided_slice %150 {offsets = [0, 96], sizes = [2, 32], strides = [1, 1]} : vector<2x128xf32> to vector<2x32xf32>
    %155 = arith.mulf %152, %147 : vector<2x32xf32>
    %156 = arith.mulf %151, %153 : vector<2x32xf32>
    %157 = arith.addf %155, %156 : vector<2x32xf32>
    %158 = math.tanh %157 : vector<2x32xf32>
    %159 = arith.mulf %154, %158 : vector<2x32xf32>
    %160 = tpu.concatenate %145, %159 in 1 : vector<2x32xf32>, vector<2x32xf32> -> vector<2x64xf32>
    %c0_22 = arith.constant 0 : index
    %c0_23 = arith.constant 0 : index
    %161 = vector.load %arg4[%c0_22, %c0_23] : memref<2x64xf32, #tpu.memory_space<vmem>>, vector<2x64xf32>
    tpu.vector_store %arg4[%c0_22, %c0_23], %160 {strides = array<i32>} : memref<2x64xf32, #tpu.memory_space<vmem>>, vector<2x64xf32>,
    return
  }
}

</mosaic_0001>

<llo_original>
// kernel: tpu_custom_call.1
$region0: #{tpu_custom_call.1}
  #allocation0 [shape = 'u32[]', space=smem, size = 0x4, offset = 0x4, fixed_abs, tag = 'smem constant byte address 0x4 - core index']
  #allocation1 [shape = 'u32[72,128]{1,0:T(1,128)}', space=vmem, size = 0x9000, scoped, tag = 'internal scratch']
  %s0 = inlined_call_operand.vmem [shape: s32[16,1], index: 0, kind: input, shape index: {}]
  %s1 = inlined_call_operand.hbm [shape: f32[16,256], index: 1, kind: input, shape index: {}]
  %s2 = inlined_call_operand.vmem [shape: f32[1,256], index: 2, kind: input, shape index: {}]
  %s3 = inlined_call_operand.hbm [shape: f32[32,128], index: 3, kind: input, shape index: {}]
  %s4 = inlined_call_operand.hbm [shape: f32[2,64], index: 4, kind: output, shape index: {}]
  %s5 = sld [smem:[#allocation0]]
  $region34: #{tpu_custom_call.1} parent=0
    _
  %s7 = ssub.s32 1, %s5
  %s8 = scalar_select 0, %s7, %s5
  $region1: #{tpu_custom_call.1} parent=0
    #allocation2 [shape = 'u8[16384]{0}', space=vmem, size = 0x4000, scoped, tag = 'input window, operand 1, single buffered']
    #allocation3 [shape = 's32[1]{0}', space=sflag, size = 0x4, scoped, tag = 'scoped memory for tpu_custom_call.1']
    #allocation4 [shape = 's32[1]{0}', space=sflag, size = 0x4, scoped, tag = 'scoped memory for tpu_custom_call.1']
    #allocation5 [shape = 'u8[16384]{0}', space=vmem, size = 0x4000, scoped, tag = 'input window, operand 3, single buffered']
    #allocation6 [shape = 's32[1]{0}', space=sflag, size = 0x4, scoped, tag = 'scoped memory for tpu_custom_call.1']
    #allocation7 [shape = 'u8[1024]{0}', space=vmem, size = 0x400, scoped, tag = 'output window, operand 0, single buffered']
    %9 = vsyncpa [#allocation3], 0
    %10 = vsyncpa [#allocation6], 0
    %11 = vsyncpa [#allocation4], 0
    // Predicated region
    $region2: #{tpu_custom_call.1} parent=1 // pred_check
      _
    $region3: #{tpu_custom_call.1} parent=1 // pred_check_branch
      %13 = sbr.rel (0) target = $region5
    $region4: #{tpu_custom_call.1} parent=1 // pred_region
      _
    $region5: #{tpu_custom_call.1} parent=1 // pred_fallthru
      _
    // Predicated region
    $region6: #{tpu_custom_call.1} parent=1 // pred_check
      _
    $region7: #{tpu_custom_call.1} parent=1 // pred_check_branch
      %15 = sbr.rel (0) target = $region9
    $region8: #{tpu_custom_call.1} parent=1 // pred_region
      %17 = vsyncadd [#allocation3], 0
      %s18 = sshll.u32 %s1, 4
      %s19 = int_to_ptr.hbm [resolvable:$true] %s18
      %s20 = sshll.u32 [#allocation2], 4
      %s21 = int_to_ptr.vmem [resolvable:$true] %s20
      %26 = dma.hbm_to_vmem [thread:$0]  %s19, 512, %s21, [#allocation3], 256, 256, 16
    $region9: #{tpu_custom_call.1} parent=1 // pred_fallthru
      _
    // Predicated region
    $region10: #{tpu_custom_call.1} parent=1 // pred_check
      _
    $region11: #{tpu_custom_call.1} parent=1 // pred_check_branch
      %28 = sbr.rel (0) target = $region13
    $region12: #{tpu_custom_call.1} parent=1 // pred_region
      _
    $region13: #{tpu_custom_call.1} parent=1 // pred_fallthru
      _
    // Predicated region
    $region14: #{tpu_custom_call.1} parent=1 // pred_check
      _
    $region15: #{tpu_custom_call.1} parent=1 // pred_check_branch
      %30 = sbr.rel (0) target = $region17
    $region16: #{tpu_custom_call.1} parent=1 // pred_region
      %32 = vsyncadd [#allocation6], 0
      %s33 = sshll.u32 %s3, 4
      %s34 = int_to_ptr.hbm [resolvable:$true] %s33
      %s35 = sshll.u32 [#allocation5], 4
      %s36 = int_to_ptr.vmem [resolvable:$true] %s35
      %41 = dma.hbm_to_vmem [thread:$0]  %s34, 512, %s36, [#allocation6], 128, 128, 8
    $region17: #{tpu_custom_call.1} parent=1 // pred_fallthru
      _
    // Predicated region
    $region18: #{tpu_custom_call.1} parent=1 // pred_check
      _
    $region19: #{tpu_custom_call.1} parent=1 // pred_check_branch
      %43 = sbr.rel (0) target = $region21
    $region20: #{tpu_custom_call.1} parent=1 // pred_region
      %45 = dma.done [#allocation3], 512
    $region21: #{tpu_custom_call.1} parent=1 // pred_fallthru
      _
    // Predicated region
    $region22: #{tpu_custom_call.1} parent=1 // pred_check
      _
    $region23: #{tpu_custom_call.1} parent=1 // pred_check_branch
      %47 = sbr.rel (0) target = $region25
    $region24: #{tpu_custom_call.1} parent=1 // pred_region
      %49 = dma.done [#allocation6], 512
    $region25: #{tpu_custom_call.1} parent=1 // pred_fallthru
      _
    %v50 = vld [vmem:[%s0] sm:$0xff]
    %v51 = vld [vmem:[%s0 + $0x8] sm:$0xff]
    %v52 = vlaneseq
    %v53 = vand.u32 %v52, 127
    %54 = vset.pattern.permute.xlu0 0
    %55 = vperm.xlu0 %54, %v50
    %v56 = vpop.permute.xlu0 %55
    %57 = vset.pattern.permute.xlu0 0
    %58 = vperm.xlu0 %57, %v51
    %v59 = vpop.permute.xlu0 %58
    %vm60 = vcmp.eq.s32.totalorder %v53, %v56
    %vm61 = vcmp.eq.s32.totalorder %v53, %v59
    %v62 = vsel %vm60, 1, 0
    %v63 = vsel %vm61, 1, 0
    %v64 = vcvt.s32.f32 %v62
    %v65 = vcvt.s32.f32 %v63
    %v66 = vld [vmem:[#allocation2] sm:$0xff]
    %v67 = vld [vmem:[#allocation2 + $0x8] sm:$0xff]
    %v68 = vld [vmem:[#allocation2 + $0x10] sm:$0xff]
    %v69 = vld [vmem:[#allocation2 + $0x18] sm:$0xff]
    %v70 = vld [vmem:[%s2] sm:$0x3]
    %v72 = vperm.slane %v70, 0
    %v73 = vperm.slane %v70, 1
    %vm76 = vcmask 130048
    %v78 = vsel %vm76, %v64, 0
    %v81 = vsel %vm76, %v65, 0
    %83 = vmatpush.msra.mxu0 0.0
    %84 = vmatpush.msra.mxu0 0.0
    %85 = vmatpush.msra.mxu0 0.0
    %86 = vmatpush.msra.mxu0 0.0
    %87 = vmatpush.msra.mxu0 0.0
    %88 = vmatpush.msra.mxu0 0.0
    %89 = vmatpush.msra.mxu0 0.0
    %90 = vmatpush.msra.mxu0 0.0
    %91 = vmatpush.msra.mxu0 0.0
    %92 = vmatpush.msra.mxu0 0.0
    %93 = vmatpush.msra.mxu0 0.0
    %94 = vmatpush.msra.mxu0 0.0
    %95 = vmatpush.msra.mxu0 0.0
    %96 = vmatpush.msra.mxu0 0.0
    %97 = vmatpush.msra.mxu0 %v68
    %98 = vmatpush.msra.mxu0 %v66
    %99 = vmatmul.f32.gmra.mxu0 %v78
    %v100 = vpop.f32.mrf.mxu0
    %v101 = vadd.f32 %v72, %v100
    %102 = vmatmul.f32.gmra.mxu0 %v81
    %v103 = vpop.f32.mrf.mxu0
    %v104 = vadd.f32 %v72, %v103
    %105 = vdwg.mxu0
    %106 = vmatpush.msra.mxu0 0.0
    %107 = vmatpush.msra.mxu0 0.0
    %108 = vmatpush.msra.mxu0 0.0
    %109 = vmatpush.msra.mxu0 0.0
    %110 = vmatpush.msra.mxu0 0.0
    %111 = vmatpush.msra.mxu0 0.0
    %112 = vmatpush.msra.mxu0 0.0
    %113 = vmatpush.msra.mxu0 0.0
    %114 = vmatpush.msra.mxu0 0.0
    %115 = vmatpush.msra.mxu0 0.0
    %116 = vmatpush.msra.mxu0 0.0
    %117 = vmatpush.msra.mxu0 0.0
    %118 = vmatpush.msra.mxu0 0.0
    %119 = vmatpush.msra.mxu0 0.0
    %120 = vmatpush.msra.mxu0 %v69
    %121 = vmatpush.msra.mxu0 %v67
    %122 = vmatmul.f32.gmra.mxu0 %v78
    %v123 = vpop.f32.mrf.mxu0
    %124 = vmatmul.f32.gmra.mxu0 %v81
    %v125 = vpop.f32.mrf.mxu0
    %v126 = vadd.f32 %v73, %v125
    %127 = vdwg.mxu0
    %v128 = vld [vmem:[#allocation5] sm:$0xff]
    %v129 = vld [vmem:[#allocation5 + $0x8] sm:$0xff]
    %v130 = vld [vmem:[#allocation5 + $0x10] sm:$0xff]
    %v131 = vld [vmem:[#allocation5 + $0x18] sm:$0xff]
    %vm132 = vcmp.ge.s32.totalorder %v53, 64
    %vm133 = vcmp.lt.s32.totalorder %v53, 96
    %vm134 = vmand %vm132, %vm133
    %v135 = vsel %vm134, 1.0, 0.5
    %v136 = vsel %vm134, 0.0, 0.5
    %vm137 = vcmask 261120
    %v139 = vsel %vm137, 0.0, 0
    %141 = vmatpush.msra.mxu0 0.0
    %142 = vmatpush.msra.mxu0 0.0
    %143 = vmatpush.msra.mxu0 0.0
    %144 = vmatpush.msra.mxu0 0.0
    %145 = vmatpush.msra.mxu0 0.0
    %146 = vmatpush.msra.mxu0 0.0
    %147 = vmatpush.msra.mxu0 0.0
    %148 = vmatpush.msra.mxu0 0.0
    %149 = vmatpush.msra.mxu0 0.0
    %150 = vmatpush.msra.mxu0 0.0
    %151 = vmatpush.msra.mxu0 0.0
    %152 = vmatpush.msra.mxu0 0.0
    %153 = vmatpush.msra.mxu0 %v131
    %154 = vmatpush.msra.mxu0 %v130
    %155 = vmatpush.msra.mxu0 %v129
    %156 = vmatpush.msra.mxu0 %v128
    %157 = vmatmul.f32.gmra.mxu0 %v139
    %v158 = vpop.f32.mrf.mxu0
    %v159 = vadd.f32 0.0, %v158
    %160 = vdwg.mxu0
    %v161 = vadd.f32 %v101, %v159
    %v162 = vtanh.pop %v161
    %v163 = vmul.f32 %v162, %v135
    %v164 = vadd.f32 %v163, %v136
    %v165 = vmul.f32 %v164, 0.0
    %167 = vrot.lane.b32.xlu0 %v164, 64
    %v168 = vpop.permute.xlu0 %167
    %v170 = vmul.f32 %v164, %v168
    %172 = vrot.lane.b32.xlu0 %v170, 32
    %v173 = vpop.permute.xlu0 %172
    %v175 = vadd.f32 %v165, %v173
    %v176 = vtanh.pop %v175
    %178 = vrot.lane.b32.xlu0 %v176, 64
    %v179 = vpop.permute.xlu0 %178
    %v181 = vmul.f32 %v164, %v179
    %183 = vrot.lane.b32.xlu0 %v181, 32
    %v184 = vpop.permute.xlu0 %183
    %v185 = vsel %vm137, %v184, 0
    %187 = vmatpush.msra.mxu0 0.0
    %188 = vmatpush.msra.mxu0 0.0
    %189 = vmatpush.msra.mxu0 0.0
    %190 = vmatpush.msra.mxu0 0.0
    %191 = vmatpush.msra.mxu0 0.0
    %192 = vmatpush.msra.mxu0 0.0
    %193 = vmatpush.msra.mxu0 0.0
    %194 = vmatpush.msra.mxu0 0.0
    %195 = vmatpush.msra.mxu0 0.0
    %196 = vmatpush.msra.mxu0 0.0
    %197 = vmatpush.msra.mxu0 0.0
    %198 = vmatpush.msra.mxu0 0.0
    %199 = vmatpush.msra.mxu0 %v131
    %200 = vmatpush.msra.mxu0 %v130
    %201 = vmatpush.msra.mxu0 %v129
    %202 = vmatpush.msra.mxu0 %v128
    %203 = vmatmul.f32.gmra.mxu0 %v185
    %v204 = vpop.f32.mrf.mxu0
    %v205 = vadd.f32 0.0, %v204
    %206 = vdwg.mxu0
    %v208 = vrot.slane %v205, 6
    %v210 = vadd.f32 %v101, %v208
    %v211 = vtanh.pop %v210
    %v212 = vmul.f32 %v211, %v135
    %v213 = vadd.f32 %v212, %v136
    %v215 = vrot.slane %v175, 6
    %v217 = vmul.f32 %v213, %v215
    %219 = vrot.lane.b32.xlu0 %v213, 64
    %v220 = vpop.permute.xlu0 %219
    %v222 = vmul.f32 %v213, %v220
    %224 = vrot.lane.b32.xlu0 %v222, 32
    %v225 = vpop.permute.xlu0 %224
    %v227 = vadd.f32 %v217, %v225
    %v228 = vtanh.pop %v227
    %230 = vrot.lane.b32.xlu0 %v228, 64
    %v231 = vpop.permute.xlu0 %230
    %v233 = vmul.f32 %v213, %v231
    %v235 = vrot.slane %v233, 2
    %236 = vrot.lane.b32.xlu0 %v235, 32
    %v237 = vpop.permute.xlu0 %236
    %v238 = vsel %vm137, %v237, 0
    %240 = vmatpush.msra.mxu0 0.0
    %241 = vmatpush.msra.mxu0 0.0
    %242 = vmatpush.msra.mxu0 0.0
    %243 = vmatpush.msra.mxu0 0.0
    %244 = vmatpush.msra.mxu0 0.0
    %245 = vmatpush.msra.mxu0 0.0
    %246 = vmatpush.msra.mxu0 0.0
    %247 = vmatpush.msra.mxu0 0.0
    %248 = vmatpush.msra.mxu0 0.0
    %249 = vmatpush.msra.mxu0 0.0
    %250 = vmatpush.msra.mxu0 0.0
    %251 = vmatpush.msra.mxu0 0.0
    %252 = vmatpush.msra.mxu0 %v131
    %253 = vmatpush.msra.mxu0 %v130
    %254 = vmatpush.msra.mxu0 %v129
    %255 = vmatpush.msra.mxu0 %v128
    %256 = vmatmul.f32.gmra.mxu0 %v238
    %v257 = vpop.f32.mrf.mxu0
    %v258 = vadd.f32 0.0, %v257
    %259 = vdwg.mxu0
    %v261 = vrot.slane %v258, 4
    %v263 = vadd.f32 %v101, %v261
    %v264 = vtanh.pop %v263
    %v265 = vmul.f32 %v264, %v135
    %v266 = vadd.f32 %v265, %v136
    %v268 = vrot.slane %v227, 6
    %v270 = vmul.f32 %v266, %v268
    %272 = vrot.lane.b32.xlu0 %v266, 64
    %v273 = vpop.permute.xlu0 %272
    %v275 = vmul.f32 %v266, %v273
    %277 = vrot.lane.b32.xlu0 %v275, 32
    %v278 = vpop.permute.xlu0 %277
    %v280 = vadd.f32 %v270, %v278
    %v281 = vtanh.pop %v280
    %283 = vrot.lane.b32.xlu0 %v281, 64
    %v284 = vpop.permute.xlu0 %283
    %v286 = vmul.f32 %v266, %v284
    %v288 = vrot.slane %v286, 4
    %289 = vrot.lane.b32.xlu0 %v288, 32
    %v290 = vpop.permute.xlu0 %289
    %v291 = vsel %vm137, %v290, 0
    %293 = vmatpush.msra.mxu0 0.0
    %294 = vmatpush.msra.mxu0 0.0
    %295 = vmatpush.msra.mxu0 0.0
    %296 = vmatpush.msra.mxu0 0.0
    %297 = vmatpush.msra.mxu0 0.0
    %298 = vmatpush.msra.mxu0 0.0
    %299 = vmatpush.msra.mxu0 0.0
    %300 = vmatpush.msra.mxu0 0.0
    %301 = vmatpush.msra.mxu0 0.0
    %302 = vmatpush.msra.mxu0 0.0
    %303 = vmatpush.msra.mxu0 0.0
    %304 = vmatpush.msra.mxu0 0.0
    %305 = vmatpush.msra.mxu0 %v131
    %306 = vmatpush.msra.mxu0 %v130
    %307 = vmatpush.msra.mxu0 %v129
    %308 = vmatpush.msra.mxu0 %v128
    %309 = vmatmul.f32.gmra.mxu0 %v291
    %v310 = vpop.f32.mrf.mxu0
    %v311 = vadd.f32 0.0, %v310
    %312 = vdwg.mxu0
    %v314 = vrot.slane %v311, 2
    %v316 = vadd.f32 %v101, %v314
    %v317 = vtanh.pop %v316
    %v318 = vmul.f32 %v317, %v135
    %v319 = vadd.f32 %v318, %v136
    %v321 = vrot.slane %v280, 6
    %v323 = vmul.f32 %v319, %v321
    %325 = vrot.lane.b32.xlu0 %v319, 64
    %v326 = vpop.permute.xlu0 %325
    %v328 = vmul.f32 %v319, %v326
    %330 = vrot.lane.b32.xlu0 %v328, 32
    %v331 = vpop.permute.xlu0 %330
    %v333 = vadd.f32 %v323, %v331
    %v334 = vtanh.pop %v333
    %336 = vrot.lane.b32.xlu0 %v334, 64
    %v337 = vpop.permute.xlu0 %336
    %v339 = vmul.f32 %v319, %v337
    %v341 = vrot.slane %v339, 6
    %342 = vrot.lane.b32.xlu0 %v341, 32
    %v343 = vpop.permute.xlu0 %342
    %v344 = vsel %vm137, %v343, 0
    %346 = vmatpush.msra.mxu0 0.0
    %347 = vmatpush.msra.mxu0 0.0
    %348 = vmatpush.msra.mxu0 0.0
    %349 = vmatpush.msra.mxu0 0.0
    %350 = vmatpush.msra.mxu0 0.0
    %351 = vmatpush.msra.mxu0 0.0
    %352 = vmatpush.msra.mxu0 0.0
    %353 = vmatpush.msra.mxu0 0.0
    %354 = vmatpush.msra.mxu0 0.0
    %355 = vmatpush.msra.mxu0 0.0
    %356 = vmatpush.msra.mxu0 0.0
    %357 = vmatpush.msra.mxu0 0.0
    %358 = vmatpush.msra.mxu0 %v131
    %359 = vmatpush.msra.mxu0 %v130
    %360 = vmatpush.msra.mxu0 %v129
    %361 = vmatpush.msra.mxu0 %v128
    %362 = vmatmul.f32.gmra.mxu0 %v344
    %v363 = vpop.f32.mrf.mxu0
    %v364 = vadd.f32 0.0, %v363
    %365 = vdwg.mxu0
    %v366 = vadd.f32 %v104, %v364
    %v367 = vtanh.pop %v366
    %v368 = vmul.f32 %v367, %v135
    %v369 = vadd.f32 %v368, %v136
    %v371 = vrot.slane %v333, 6
    %v373 = vmul.f32 %v369, %v371
    %375 = vrot.lane.b32.xlu0 %v369, 64
    %v376 = vpop.permute.xlu0 %375
    %v378 = vmul.f32 %v369, %v376
    %380 = vrot.lane.b32.xlu0 %v378, 32
    %v381 = vpop.permute.xlu0 %380
    %v383 = vadd.f32 %v373, %v381
    %v384 = vtanh.pop %v383
    %386 = vrot.lane.b32.xlu0 %v384, 64
    %v387 = vpop.permute.xlu0 %386
    %v389 = vmul.f32 %v369, %v387
    %391 = vrot.lane.b32.xlu0 %v389, 32
    %v392 = vpop.permute.xlu0 %391
    %v393 = vsel %vm137, %v392, 0
    %395 = vmatpush.msra.mxu0 0.0
    %396 = vmatpush.msra.mxu0 0.0
    %397 = vmatpush.msra.mxu0 0.0
    %398 = vmatpush.msra.mxu0 0.0
    %399 = vmatpush.msra.mxu0 0.0
    %400 = vmatpush.msra.mxu0 0.0
    %401 = vmatpush.msra.mxu0 0.0
    %402 = vmatpush.msra.mxu0 0.0
    %403 = vmatpush.msra.mxu0 0.0
    %404 = vmatpush.msra.mxu0 0.0
    %405 = vmatpush.msra.mxu0 0.0
    %406 = vmatpush.msra.mxu0 0.0
    %407 = vmatpush.msra.mxu0 %v131
    %408 = vmatpush.msra.mxu0 %v130
    %409 = vmatpush.msra.mxu0 %v129
    %410 = vmatpush.msra.mxu0 %v128
    %411 = vmatmul.f32.gmra.mxu0 %v393
    %v412 = vpop.f32.mrf.mxu0
    %v413 = vadd.f32 0.0, %v412
    %414 = vdwg.mxu0
    %v416 = vrot.slane %v413, 6
    %v418 = vadd.f32 %v104, %v416
    %v419 = vtanh.pop %v418
    %v420 = vmul.f32 %v419, %v135
    %v421 = vadd.f32 %v420, %v136
    %v423 = vrot.slane %v383, 6
    %v425 = vmul.f32 %v421, %v423
    %427 = vrot.lane.b32.xlu0 %v421, 64
    %v428 = vpop.permute.xlu0 %427
    %v430 = vmul.f32 %v421, %v428
    %432 = vrot.lane.b32.xlu0 %v430, 32
    %v433 = vpop.permute.xlu0 %432
    %v435 = vadd.f32 %v425, %v433
    %v436 = vtanh.pop %v435
    %438 = vrot.lane.b32.xlu0 %v436, 64
    %v439 = vpop.permute.xlu0 %438
    %v441 = vmul.f32 %v421, %v439
    %v443 = vrot.slane %v441, 2
    %444 = vrot.lane.b32.xlu0 %v443, 32
    %v445 = vpop.permute.xlu0 %444
    %v446 = vsel %vm137, %v445, 0
    %448 = vmatpush.msra.mxu0 0.0
    %449 = vmatpush.msra.mxu0 0.0
    %450 = vmatpush.msra.mxu0 0.0
    %451 = vmatpush.msra.mxu0 0.0
    %452 = vmatpush.msra.mxu0 0.0
    %453 = vmatpush.msra.mxu0 0.0
    %454 = vmatpush.msra.mxu0 0.0
    %455 = vmatpush.msra.mxu0 0.0
    %456 = vmatpush.msra.mxu0 0.0
    %457 = vmatpush.msra.mxu0 0.0
    %458 = vmatpush.msra.mxu0 0.0
    %459 = vmatpush.msra.mxu0 0.0
    %460 = vmatpush.msra.mxu0 %v131
    %461 = vmatpush.msra.mxu0 %v130
    %462 = vmatpush.msra.mxu0 %v129
    %463 = vmatpush.msra.mxu0 %v128
    %464 = vmatmul.f32.gmra.mxu0 %v446
    %v465 = vpop.f32.mrf.mxu0
    %v466 = vadd.f32 0.0, %v465
    %467 = vdwg.mxu0
    %v469 = vrot.slane %v466, 4
    %v471 = vadd.f32 %v104, %v469
    %v472 = vtanh.pop %v471
    %v473 = vmul.f32 %v472, %v135
    %v474 = vadd.f32 %v473, %v136
    %v476 = vrot.slane %v435, 6
    %v478 = vmul.f32 %v474, %v476
    %480 = vrot.lane.b32.xlu0 %v474, 64
    %v481 = vpop.permute.xlu0 %480
    %v483 = vmul.f32 %v474, %v481
    %485 = vrot.lane.b32.xlu0 %v483, 32
    %v486 = vpop.permute.xlu0 %485
    %v488 = vadd.f32 %v478, %v486
    %v489 = vtanh.pop %v488
    %491 = vrot.lane.b32.xlu0 %v489, 64
    %v492 = vpop.permute.xlu0 %491
    %v494 = vmul.f32 %v474, %v492
    %v496 = vrot.slane %v494, 4
    %497 = vrot.lane.b32.xlu0 %v496, 32
    %v498 = vpop.permute.xlu0 %497
    %v499 = vsel %vm137, %v498, 0
    %501 = vmatpush.msra.mxu0 0.0
    %502 = vmatpush.msra.mxu0 0.0
    %503 = vmatpush.msra.mxu0 0.0
    %504 = vmatpush.msra.mxu0 0.0
    %505 = vmatpush.msra.mxu0 0.0
    %506 = vmatpush.msra.mxu0 0.0
    %507 = vmatpush.msra.mxu0 0.0
    %508 = vmatpush.msra.mxu0 0.0
    %509 = vmatpush.msra.mxu0 0.0
    %510 = vmatpush.msra.mxu0 0.0
    %511 = vmatpush.msra.mxu0 0.0
    %512 = vmatpush.msra.mxu0 0.0
    %513 = vmatpush.msra.mxu0 %v131
    %514 = vmatpush.msra.mxu0 %v130
    %515 = vmatpush.msra.mxu0 %v129
    %516 = vmatpush.msra.mxu0 %v128
    %517 = vmatmul.f32.gmra.mxu0 %v499
    %v518 = vpop.f32.mrf.mxu0
    %v519 = vadd.f32 0.0, %v518
    %520 = vdwg.mxu0
    %v522 = vrot.slane %v519, 2
    %v524 = vadd.f32 %v104, %v522
    %v525 = vtanh.pop %v524
    %v526 = vmul.f32 %v525, %v135
    %v527 = vadd.f32 %v526, %v136
    %v529 = vrot.slane %v488, 6
    %v531 = vmul.f32 %v527, %v529
    %533 = vrot.lane.b32.xlu0 %v527, 64
    %v534 = vpop.permute.xlu0 %533
    %v536 = vmul.f32 %v527, %v534
    %538 = vrot.lane.b32.xlu0 %v536, 32
    %v539 = vpop.permute.xlu0 %538
    %v541 = vadd.f32 %v531, %v539
    %v542 = vtanh.pop %v541
    %544 = vrot.lane.b32.xlu0 %v542, 64
    %v545 = vpop.permute.xlu0 %544
    %v547 = vmul.f32 %v527, %v545
    %v548 = vtanh.pop %v126
    %v549 = vmul.f32 %v548, %v135
    %v550 = vadd.f32 %v549, %v136
    %v551 = vmul.f32 %v550, 0.0
    %553 = vrot.lane.b32.xlu0 %v550, 64
    %v554 = vpop.permute.xlu0 %553
    %v556 = vmul.f32 %v550, %v554
    %558 = vrot.lane.b32.xlu0 %v556, 32
    %v559 = vpop.permute.xlu0 %558
    %v561 = vadd.f32 %v551, %v559
    %v562 = vtanh.pop %v561
    %564 = vrot.lane.b32.xlu0 %v562, 64
    %v565 = vpop.permute.xlu0 %564
    %v567 = vmul.f32 %v550, %v565
    %569 = vrot.lane.b32.xlu0 %v547, 32
    %v570 = vpop.permute.xlu0 %569
    %573 = vrot.lane.b32.xlu0 %v567, 64
    %v574 = vpop.permute.xlu0 %573
    %v576 = vsel %vm137, %v570, %v574
    %vm577 = vcmask 523270
    %578 = vst.msk [vmem:[#allocation7 - $0x6] sm:$0xc0] %vm577, %v576
    // Predicated region
    $region26: #{tpu_custom_call.1} parent=1 // pred_check
      _
    $region27: #{tpu_custom_call.1} parent=1 // pred_check_branch
      %580 = sbr.rel (0) target = $region29
    $region28: #{tpu_custom_call.1} parent=1 // pred_region
      %582 = vsyncadd [#allocation4], 0
      %s584 = sshll.u32 [#allocation7], 4
      %s585 = int_to_ptr.vmem [resolvable:$true] %s584
      %s586 = sshll.u32 %s4, 4
      %s587 = int_to_ptr.hbm [resolvable:$true] %s586
      %589 = dma.vmem_to_hbm [thread:$0]  %s585, 32, %s587, [#allocation4]
    $region29: #{tpu_custom_call.1} parent=1 // pred_fallthru
      _
    // Predicated region
    $region30: #{tpu_custom_call.1} parent=1 // pred_check
      _
    $region31: #{tpu_custom_call.1} parent=1 // pred_check_branch
      %591 = sbr.rel (0) target = $region33
    $region32: #{tpu_custom_call.1} parent=1 // pred_region
      %593 = dma.done [#allocation4], 32
    $region33: #{tpu_custom_call.1} parent=1 // pred_fallthru
      _
    %594 = vsyncpa [#allocation3], 1
    %595 = vsyncpa [#allocation6], 1
    %596 = vsyncpa [#allocation4], 1

</llo_original>
